<compile_context>
chip_gen: v5e
topology: v5e:2x2
jax: 0.10.0
libtpu: 0.0.40
codegen_flags: <defaults>
</compile_context>

<pallas_src>
import functools

import jax
import jax.numpy as jnp
from jax.experimental import pallas as pl
from jax.experimental.pallas import tpu as pltpu

HIDDEN = 256
LANE = 128
SUBLANE = 8


def _round_up(x, m):
    return ((x + m - 1) // m) * m


def _actor_kernel(x_ref, w1_ref, b1_ref, w2_ref, b2_ref, w3_ref, b3_ref,
                  o_ref, *, max_action):
    # One batch tile per grid step; whole MLP fused, all weights in VMEM.
    cd = w1_ref.dtype  # compute dtype for the MXU (bf16 or f32)

    h1 = jnp.dot(x_ref[...], w1_ref[...],
                 preferred_element_type=jnp.float32) + b1_ref[...]
    h1 = jnp.maximum(h1, 0.0).astype(cd)

    h2 = jnp.dot(h1, w2_ref[...],
                 preferred_element_type=jnp.float32) + b2_ref[...]
    h2 = jnp.maximum(h2, 0.0).astype(cd)

    h3 = jnp.dot(h2, w3_ref[...],
                 preferred_element_type=jnp.float32) + b3_ref[...]
    o_ref[...] = (max_action * jnp.tanh(h3)).astype(o_ref.dtype)


def actor1_forward(state, params, max_action, *, batch_tile=256,
                   compute_dtype=jnp.bfloat16):
    """Pallas forward pass for Actor1.

    state:  [B, state_dim] float32
    params: dict with w1 [state_dim,256], b1 [256], w2 [256,256], b2 [256],
            w3 [256,action_dim], b3 [action_dim]
    """
    B, state_dim = state.shape
    action_dim = params["w3"].shape[1]
    out_dtype = state.dtype

    # Lane-dense padding of the small feature dims.
    state_dim_p = _round_up(state_dim, LANE)
    action_dim_p = _round_up(action_dim, LANE)

    # Batch tile: multiple of 8, collapse to one grid step for tiny batches.
    bt = _round_up(min(batch_tile, _round_up(B, SUBLANE)), SUBLANE)
    B_p = _round_up(B, bt)

    # --- wrapper-side padding / casting ---------------------------------
    x = state
    if state_dim_p != state_dim:
        x = jnp.pad(x, ((0, 0), (0, state_dim_p - state_dim)))
    if B_p != B:
        x = jnp.pad(x, ((0, B_p - B), (0, 0)))
    x = x.astype(compute_dtype)

    w1 = params["w1"]
    if state_dim_p != state_dim:
        w1 = jnp.pad(w1, ((0, state_dim_p - state_dim), (0, 0)))
    w1 = w1.astype(compute_dtype)
    w2 = params["w2"].astype(compute_dtype)
    w3 = params["w3"]
    b3 = params["b3"]
    if action_dim_p != action_dim:
        w3 = jnp.pad(w3, ((0, 0), (0, action_dim_p - action_dim)))
        b3 = jnp.pad(b3, ((0, action_dim_p - action_dim),))
    w3 = w3.astype(compute_dtype)

    # Biases stay f32, shaped (1, N) for clean broadcast in-kernel.
    b1 = params["b1"].reshape(1, HIDDEN).astype(jnp.float32)
    b2 = params["b2"].reshape(1, HIDDEN).astype(jnp.float32)
    b3 = b3.reshape(1, action_dim_p).astype(jnp.float32)

    kernel = functools.partial(_actor_kernel, max_action=float(max_action))

    grid_spec = pl.GridSpec(
        grid=(B_p // bt,),
        in_specs=[
            pl.BlockSpec((bt, state_dim_p), lambda i: (i, 0)),        # x tile
            pl.BlockSpec((state_dim_p, HIDDEN), lambda i: (0, 0)),    # w1
            pl.BlockSpec((1, HIDDEN), lambda i: (0, 0)),              # b1
            pl.BlockSpec((HIDDEN, HIDDEN), lambda i: (0, 0)),         # w2
            pl.BlockSpec((1, HIDDEN), lambda i: (0, 0)),              # b2
            pl.BlockSpec((HIDDEN, action_dim_p), lambda i: (0, 0)),   # w3
            pl.BlockSpec((1, action_dim_p), lambda i: (0, 0)),        # b3
        ],
        out_specs=pl.BlockSpec((bt, action_dim_p), lambda i: (i, 0)),
    )

    out = pl.pallas_call(
        kernel,
        out_shape=jax.ShapeDtypeStruct((B_p, action_dim_p), out_dtype),
        grid_spec=grid_spec,
        compiler_params=pltpu.CompilerParams(
            dimension_semantics=("parallel",)),
    )(x, w1, b1, w2, b2, w3, b3)

    # Slice off batch / lane padding.
    return out[:B, :action_dim]


def init_actor1_params(key, state_dim, action_dim):
    """Deterministic init mimicking nn.Linear default (U[-1/sqrt(fan_in), +])."""
    ks = jax.random.split(key, 6)

    def linear(kw, kb, fan_in, fan_out):
        bound = 1.0 / jnp.sqrt(fan_in)
        w = jax.random.uniform(kw, (fan_in, fan_out), jnp.float32, -bound, bound)
        b = jax.random.uniform(kb, (fan_out,), jnp.float32, -bound, bound)
        return w, b

    w1, b1 = linear(ks[0], ks[1], state_dim, HIDDEN)
    w2, b2 = linear(ks[2], ks[3], HIDDEN, HIDDEN)
    w3, b3 = linear(ks[4], ks[5], HIDDEN, action_dim)
    return {"w1": w1, "b1": b1, "w2": w2, "b2": b2, "w3": w3, "b3": b3}


def actor1_reference(state, params, max_action):
    h1 = jnp.maximum(state @ params["w1"] + params["b1"], 0.0)
    h2 = jnp.maximum(h1 @ params["w2"] + params["b2"], 0.0)
    return max_action * jnp.tanh(h2 @ params["w3"] + params["b3"])


if __name__ == "__main__":
    key = jax.random.PRNGKey(0)
    k_params, k_state1, k_state2 = jax.random.split(key, 3)

    state_dim, action_dim = 32, 8
    max_action = 2.0
    params = init_actor1_params(k_params, state_dim, action_dim)

    # --- test 1: small batch, f32 compute, strict tolerance -------------
    batch1 = 8
    state1 = jax.random.normal(k_state1, (batch1, state_dim), jnp.float32)
    out1 = jax.block_until_ready(
        actor1_forward(state1, params, max_action, compute_dtype=jnp.float32))
    ref1 = actor1_reference(state1, params, max_action)
    assert out1.shape == (batch1, action_dim)
    assert jnp.allclose(out1, ref1, atol=1e-5, rtol=1e-5), "f32 mismatch"

    # --- test 2: non-multiple batch, bf16 compute (fast path) -----------
    batch2 = 300  # exercises batch padding and a 2-step "parallel" grid
    state2 = jax.random.normal(k_state2, (batch2, state_dim), jnp.float32)
    out2 = jax.block_until_ready(
        actor1_forward(state2, params, max_action,
                       batch_tile=256, compute_dtype=jnp.bfloat16))
    ref2 = actor1_reference(state2, params, max_action)
    assert out2.shape == (batch2, action_dim)
    assert jnp.allclose(out2, ref2, atol=5e-2, rtol=5e-2), "bf16 mismatch"

    print("KERNEL_OK")
</pallas_src>

<mosaic_0001>
module attributes {stable_mosaic.version = 11 : i64} {
  func.func @_actor_kernel(%arg0: i32, %arg1: memref<8x128xf32, #tpu.memory_space<vmem>>, %arg2: memref<128x256xf32, #tpu.memory_space<vmem>>, %arg3: memref<1x256xf32, #tpu.memory_space<vmem>>, %arg4: memref<256x256xf32, #tpu.memory_space<vmem>>, %arg5: memref<1x256xf32, #tpu.memory_space<vmem>>, %arg6: memref<256x128xf32, #tpu.memory_space<vmem>>, %arg7: memref<1x128xf32, #tpu.memory_space<vmem>>, %arg8: memref<8x128xf32, #tpu.memory_space<vmem>>) attributes {dimension_semantics = [#tpu.dimension_semantics<parallel>], iteration_bounds = array<i64: 1>, scalar_prefetch = 0 : i64, scratch_operands = 0 : i64, tpu.core_type = #tpu.core_type<tc>, window_params = [{transform_indices = @transform_0, window_bounds = array<i64: 8, 128>}, {pipeline_mode = #tpu.pipeline_mode<synchronous>, transform_indices = @transform_1, window_bounds = array<i64: 128, 256>}, {pipeline_mode = #tpu.pipeline_mode<synchronous>, transform_indices = @transform_2, window_bounds = array<i64: 1, 256>}, {pipeline_mode = #tpu.pipeline_mode<synchronous>, transform_indices = @transform_3, window_bounds = array<i64: 256, 256>}, {pipeline_mode = #tpu.pipeline_mode<synchronous>, transform_indices = @transform_4, window_bounds = array<i64: 1, 256>}, {pipeline_mode = #tpu.pipeline_mode<synchronous>, transform_indices = @transform_5, window_bounds = array<i64: 256, 128>}, {pipeline_mode = #tpu.pipeline_mode<synchronous>, transform_indices = @transform_6, window_bounds = array<i64: 1, 128>}, {transform_indices = @transform_7, window_bounds = array<i64: 8, 128>}]} {
    %c0 = arith.constant 0 : index
    %c0_0 = arith.constant 0 : index
    %0 = vector.load %arg1[%c0, %c0_0] : memref<8x128xf32, #tpu.memory_space<vmem>>, vector<8x128xf32>
    %c0_1 = arith.constant 0 : index
    %c0_2 = arith.constant 0 : index
    %1 = vector.load %arg2[%c0_1, %c0_2] : memref<128x256xf32, #tpu.memory_space<vmem>>, vector<128x256xf32>
    %cst = arith.constant dense<0.000000e+00> : vector<8x256xf32>
    %2 = tpu.matmul %0, %1, %cst {dimension_numbers = #tpu.dot_dimension_numbers<[1], [0], [0], [1], [0, 0, 1, 1], [], []>} : vector<8x128xf32>, vector<128x256xf32>, vector<8x256xf32> -> vector<8x256xf32>
    %c0_3 = arith.constant 0 : index
    %c0_4 = arith.constant 0 : index
    %3 = vector.load %arg3[%c0_3, %c0_4] : memref<1x256xf32, #tpu.memory_space<vmem>>, vector<1x256xf32>
    %4 = vector.broadcast %3 : vector<1x256xf32> to vector<8x256xf32>
    %5 = arith.addf %2, %4 : vector<8x256xf32>
    %cst_5 = arith.constant 0.000000e+00 : f32
    %6 = vector.broadcast %cst_5 : f32 to vector<8x256xf32>
    %7 = arith.maximumf %5, %6 : vector<8x256xf32>
    %c0_6 = arith.constant 0 : index
    %c0_7 = arith.constant 0 : index
    %8 = vector.load %arg4[%c0_6, %c0_7] : memref<256x256xf32, #tpu.memory_space<vmem>>, vector<256x256xf32>
    %cst_8 = arith.constant dense<0.000000e+00> : vector<8x256xf32>
    %9 = tpu.matmul %7, %8, %cst_8 {dimension_numbers = #tpu.dot_dimension_numbers<[1], [0], [0], [1], [0, 0, 1, 1], [], []>} : vector<8x256xf32>, vector<256x256xf32>, vector<8x256xf32> -> vector<8x256xf32>
    %c0_9 = arith.constant 0 : index
    %c0_10 = arith.constant 0 : index
    %10 = vector.load %arg5[%c0_9, %c0_10] : memref<1x256xf32, #tpu.memory_space<vmem>>, vector<1x256xf32>
    %11 = vector.broadcast %10 : vector<1x256xf32> to vector<8x256xf32>
    %12 = arith.addf %9, %11 : vector<8x256xf32>
    %cst_11 = arith.constant 0.000000e+00 : f32
    %13 = vector.broadcast %cst_11 : f32 to vector<8x256xf32>
    %14 = arith.maximumf %12, %13 : vector<8x256xf32>
    %c0_12 = arith.constant 0 : index
    %c0_13 = arith.constant 0 : index
    %15 = vector.load %arg6[%c0_12, %c0_13] : memref<256x128xf32, #tpu.memory_space<vmem>>, vector<256x128xf32>
    %cst_14 = arith.constant dense<0.000000e+00> : vector<8x128xf32>
    %16 = tpu.matmul %14, %15, %cst_14 {dimension_numbers = #tpu.dot_dimension_numbers<[1], [0], [0], [1], [0, 0, 1, 1], [], []>} : vector<8x256xf32>, vector<256x128xf32>, vector<8x128xf32> -> vector<8x128xf32>
    %c0_15 = arith.constant 0 : index
    %c0_16 = arith.constant 0 : index
    %17 = vector.load %arg7[%c0_15, %c0_16] : memref<1x128xf32, #tpu.memory_space<vmem>>, vector<1x128xf32>
    %18 = vector.broadcast %17 : vector<1x128xf32> to vector<8x128xf32>
    %19 = arith.addf %16, %18 : vector<8x128xf32>
    %20 = math.tanh %19 : vector<8x128xf32>
    %cst_17 = arith.constant 2.000000e+00 : f32
    %21 = vector.broadcast %cst_17 : f32 to vector<8x128xf32>
    %22 = arith.mulf %21, %20 : vector<8x128xf32>
    %c0_18 = arith.constant 0 : index
    %c0_19 = arith.constant 0 : index
    %23 = vector.load %arg8[%c0_18, %c0_19] : memref<8x128xf32, #tpu.memory_space<vmem>>, vector<8x128xf32>
    tpu.vector_store %arg8[%c0_18, %c0_19], %22 {strides = array<i32>} : memref<8x128xf32, #tpu.memory_space<vmem>>, vector<8x128xf32>,
    return
  }
  func.func @transform_0(%arg0: i32) -> (i32, i32) {
    %c0_i32 = arith.constant 0 : i32
    %c0_i32_0 = arith.constant 0 : i32
    return %arg0, %c0_i32 : i32, i32
  }
  func.func @transform_1(%arg0: i32) -> (i32, i32) {
    %c0_i32 = arith.constant 0 : i32
    %c0_i32_0 = arith.constant 0 : i32
    %c0_i32_1 = arith.constant 0 : i32
    return %c0_i32, %c0_i32_0 : i32, i32
  }
  func.func @transform_2(%arg0: i32) -> (i32, i32) {
    %c0_i32 = arith.constant 0 : i32
    %c0_i32_0 = arith.constant 0 : i32
    %c0_i32_1 = arith.constant 0 : i32
    return %c0_i32, %c0_i32_0 : i32, i32
  }
  func.func @transform_3(%arg0: i32) -> (i32, i32) {
    %c0_i32 = arith.constant 0 : i32
    %c0_i32_0 = arith.constant 0 : i32
    %c0_i32_1 = arith.constant 0 : i32
    return %c0_i32, %c0_i32_0 : i32, i32
  }
  func.func @transform_4(%arg0: i32) -> (i32, i32) {
    %c0_i32 = arith.constant 0 : i32
    %c0_i32_0 = arith.constant 0 : i32
    %c0_i32_1 = arith.constant 0 : i32
    return %c0_i32, %c0_i32_0 : i32, i32
  }
  func.func @transform_5(%arg0: i32) -> (i32, i32) {
    %c0_i32 = arith.constant 0 : i32
    %c0_i32_0 = arith.constant 0 : i32
    %c0_i32_1 = arith.constant 0 : i32
    return %c0_i32, %c0_i32_0 : i32, i32
  }
  func.func @transform_6(%arg0: i32) -> (i32, i32) {
    %c0_i32 = arith.constant 0 : i32
    %c0_i32_0 = arith.constant 0 : i32
    %c0_i32_1 = arith.constant 0 : i32
    return %c0_i32, %c0_i32_0 : i32, i32
  }
  func.func @transform_7(%arg0: i32) -> (i32, i32) {
    %c0_i32 = arith.constant 0 : i32
    %c0_i32_0 = arith.constant 0 : i32
    return %arg0, %c0_i32 : i32, i32
  }
}

</mosaic_0001>

<llo_original>
// kernel: tpu_custom_call.1
$region0: #{tpu_custom_call.1}
  #allocation0 [shape = 'u32[]', space=smem, size = 0x4, offset = 0x4, fixed_abs, tag = 'smem constant byte address 0x4 - core index']
  #allocation1 [shape = 'u32[72,128]{1,0:T(1,128)}', space=vmem, size = 0x9000, scoped, tag = 'internal scratch']
  %s0 = inlined_call_operand.hbm [shape: f32[8,128], index: 0, kind: input, shape index: {}]
  %s1 = inlined_call_operand.hbm [shape: f32[128,256], index: 1, kind: input, shape index: {}]
  %s2 = inlined_call_operand.hbm [shape: f32[1,256], index: 2, kind: input, shape index: {}]
  %s3 = inlined_call_operand.hbm [shape: f32[256,256], index: 3, kind: input, shape index: {}]
  %s4 = inlined_call_operand.vmem [shape: f32[1,256], index: 4, kind: input, shape index: {}]
  %s5 = inlined_call_operand.hbm [shape: f32[256,128], index: 5, kind: input, shape index: {}]
  %s6 = inlined_call_operand.vmem [shape: f32[1,128], index: 6, kind: input, shape index: {}]
  %s7 = inlined_call_operand.hbm [shape: f32[8,128], index: 7, kind: output, shape index: {}]
  %s8 = sld [smem:[#allocation0]]
  $region58: #{tpu_custom_call.1} parent=0
    _
  %s10 = ssub.s32 1, %s8
  %s11 = scalar_select 0, %s10, %s8
  $region1: #{tpu_custom_call.1} parent=0
    #allocation2 [shape = 'u8[4096]{0}', space=vmem, size = 0x1000, scoped, tag = 'input window, operand 0, single buffered']
    #allocation3 [shape = 's32[1]{0}', space=sflag, size = 0x4, scoped, tag = 'scoped memory for tpu_custom_call.1']
    #allocation4 [shape = 's32[1]{0}', space=sflag, size = 0x4, scoped, tag = 'scoped memory for tpu_custom_call.1']
    #allocation5 [shape = 'u8[131072]{0}', space=vmem, size = 0x20000, scoped, tag = 'input window, operand 1, single buffered']
    #allocation6 [shape = 's32[1]{0}', space=sflag, size = 0x4, scoped, tag = 'scoped memory for tpu_custom_call.1']
    #allocation7 [shape = 'u8[1024]{0}', space=vmem, size = 0x400, scoped, tag = 'input window, operand 2, single buffered']
    #allocation8 [shape = 'u8[262144]{0}', space=vmem, size = 0x40000, scoped, tag = 'input window, operand 3, single buffered']
    #allocation9 [shape = 's32[1]{0}', space=sflag, size = 0x4, scoped, tag = 'scoped memory for tpu_custom_call.1']
    #allocation10 [shape = 'u8[131072]{0}', space=vmem, size = 0x20000, scoped, tag = 'input window, operand 5, single buffered']
    #allocation11 [shape = 'u8[4096]{0}', space=vmem, size = 0x1000, scoped, tag = 'output window, operand 0, single buffered']
    %12 = vsyncpa [#allocation3], 0
    %13 = vsyncpa [#allocation6], 0
    %14 = vsyncpa [#allocation9], 0
    %15 = vsyncpa [#allocation4], 0
    // Predicated region
    $region2: #{tpu_custom_call.1} parent=1 // pred_check
      _
    $region3: #{tpu_custom_call.1} parent=1 // pred_check_branch
      %17 = sbr.rel (0) target = $region5
    $region4: #{tpu_custom_call.1} parent=1 // pred_region
      %19 = vsyncadd [#allocation3], 0
      %s21 = sshll.u32 %s0, 4
      %s22 = int_to_ptr.hbm [resolvable:$true] %s21
      %s23 = sshll.u32 [#allocation2], 4
      %s24 = int_to_ptr.vmem [resolvable:$true] %s23
      %26 = dma.hbm_to_vmem [thread:$0]  %s22, 128, %s24, [#allocation3]
    $region5: #{tpu_custom_call.1} parent=1 // pred_fallthru
      _
    // Predicated region
    $region6: #{tpu_custom_call.1} parent=1 // pred_check
      _
    $region7: #{tpu_custom_call.1} parent=1 // pred_check_branch
      %28 = sbr.rel (0) target = $region9
    $region8: #{tpu_custom_call.1} parent=1 // pred_region
      %30 = vsyncadd [#allocation6], 0
      %s31 = sshll.u32 %s1, 4
      %s32 = int_to_ptr.hbm [resolvable:$true] %s31
      %s33 = sshll.u32 [#allocation5], 4
      %s34 = int_to_ptr.vmem [resolvable:$true] %s33
      %39 = dma.hbm_to_vmem [thread:$0]  %s32, 4096, %s34, [#allocation6], 256, 256, 16
    $region9: #{tpu_custom_call.1} parent=1 // pred_fallthru
      _
    // Predicated region
    $region10: #{tpu_custom_call.1} parent=1 // pred_check
      _
    $region11: #{tpu_custom_call.1} parent=1 // pred_check_branch
      %41 = sbr.rel (0) target = $region13
    $region12: #{tpu_custom_call.1} parent=1 // pred_region
      %43 = vsyncadd [#allocation6], 0
      %s45 = sshll.u32 %s2, 4
      %s46 = int_to_ptr.hbm [resolvable:$true] %s45
      %s47 = sshll.u32 [#allocation7], 4
      %s48 = int_to_ptr.vmem [resolvable:$true] %s47
      %50 = dma.hbm_to_vmem [thread:$0]  %s46, 32, %s48, [#allocation6]
    $region13: #{tpu_custom_call.1} parent=1 // pred_fallthru
      _
    // Predicated region
    $region14: #{tpu_custom_call.1} parent=1 // pred_check
      _
    $region15: #{tpu_custom_call.1} parent=1 // pred_check_branch
      %52 = sbr.rel (0) target = $region17
    $region16: #{tpu_custom_call.1} parent=1 // pred_region
      %54 = vsyncadd [#allocation9], 0
      %s55 = sshll.u32 %s3, 4
      %s56 = int_to_ptr.hbm [resolvable:$true] %s55
      %s57 = sshll.u32 [#allocation8], 4
      %s58 = int_to_ptr.vmem [resolvable:$true] %s57
      %63 = dma.hbm_to_vmem [thread:$0]  %s56, 8192, %s58, [#allocation9], 256, 256, 16
    $region17: #{tpu_custom_call.1} parent=1 // pred_fallthru
      _
    // Predicated region
    $region18: #{tpu_custom_call.1} parent=1 // pred_check
      _
    $region19: #{tpu_custom_call.1} parent=1 // pred_check_branch
      %65 = sbr.rel (0) target = $region21
    $region20: #{tpu_custom_call.1} parent=1 // pred_region
      _
    $region21: #{tpu_custom_call.1} parent=1 // pred_fallthru
      _
    // Predicated region
    $region22: #{tpu_custom_call.1} parent=1 // pred_check
      _
    $region23: #{tpu_custom_call.1} parent=1 // pred_check_branch
      %67 = sbr.rel (0) target = $region25
    $region24: #{tpu_custom_call.1} parent=1 // pred_region
      %69 = vsyncadd [#allocation9], 0
      %s70 = sshll.u32 %s5, 4
      %s71 = int_to_ptr.hbm [resolvable:$true] %s70
      %s72 = sshll.u32 [#allocation10], 4
      %s73 = int_to_ptr.vmem [resolvable:$true] %s72
      %78 = dma.hbm_to_vmem [thread:$0]  %s71, 4096, %s73, [#allocation9], 128, 128, 8
    $region25: #{tpu_custom_call.1} parent=1 // pred_fallthru
      _
    // Predicated region
    $region26: #{tpu_custom_call.1} parent=1 // pred_check
      _
    $region27: #{tpu_custom_call.1} parent=1 // pred_check_branch
      %80 = sbr.rel (0) target = $region29
    $region28: #{tpu_custom_call.1} parent=1 // pred_region
      _
    $region29: #{tpu_custom_call.1} parent=1 // pred_fallthru
      _
    // Predicated region
    $region30: #{tpu_custom_call.1} parent=1 // pred_check
      _
    $region31: #{tpu_custom_call.1} parent=1 // pred_check_branch
      %82 = sbr.rel (0) target = $region33
    $region32: #{tpu_custom_call.1} parent=1 // pred_region
      %84 = dma.done [#allocation3], 128
    $region33: #{tpu_custom_call.1} parent=1 // pred_fallthru
      _
    // Predicated region
    $region34: #{tpu_custom_call.1} parent=1 // pred_check
      _
    $region35: #{tpu_custom_call.1} parent=1 // pred_check_branch
      %86 = sbr.rel (0) target = $region37
    $region36: #{tpu_custom_call.1} parent=1 // pred_region
      %88 = dma.done [#allocation6], 4096
    $region37: #{tpu_custom_call.1} parent=1 // pred_fallthru
      _
    // Predicated region
    $region38: #{tpu_custom_call.1} parent=1 // pred_check
      _
    $region39: #{tpu_custom_call.1} parent=1 // pred_check_branch
      %90 = sbr.rel (0) target = $region41
    $region40: #{tpu_custom_call.1} parent=1 // pred_region
      %92 = dma.done [#allocation6], 32
    $region41: #{tpu_custom_call.1} parent=1 // pred_fallthru
      _
    // Predicated region
    $region42: #{tpu_custom_call.1} parent=1 // pred_check
      _
    $region43: #{tpu_custom_call.1} parent=1 // pred_check_branch
      %94 = sbr.rel (0) target = $region45
    $region44: #{tpu_custom_call.1} parent=1 // pred_region
      %96 = dma.done [#allocation9], 8192
    $region45: #{tpu_custom_call.1} parent=1 // pred_fallthru
      _
    // Predicated region
    $region46: #{tpu_custom_call.1} parent=1 // pred_check
      _
    $region47: #{tpu_custom_call.1} parent=1 // pred_check_branch
      %98 = sbr.rel (0) target = $region49
    $region48: #{tpu_custom_call.1} parent=1 // pred_region
      %100 = dma.done [#allocation9], 4096
    $region49: #{tpu_custom_call.1} parent=1 // pred_fallthru
      _
    %v101 = vld [vmem:[#allocation2] sm:$0xff]
    %v102 = vld [vmem:[#allocation5] sm:$0xff]
    %v103 = vld [vmem:[#allocation5 + $0x8] sm:$0xff]
    %v104 = vld [vmem:[#allocation5 + $0x10] sm:$0xff]
    %v105 = vld [vmem:[#allocation5 + $0x18] sm:$0xff]
    %v106 = vld [vmem:[#allocation5 + $0x20] sm:$0xff]
    %v107 = vld [vmem:[#allocation5 + $0x28] sm:$0xff]
    %v108 = vld [vmem:[#allocation5 + $0x30] sm:$0xff]
    %v109 = vld [vmem:[#allocation5 + $0x38] sm:$0xff]
    %v110 = vld [vmem:[#allocation5 + $0x40] sm:$0xff]
    %v111 = vld [vmem:[#allocation5 + $0x48] sm:$0xff]
    %v112 = vld [vmem:[#allocation5 + $0x50] sm:$0xff]
    %v113 = vld [vmem:[#allocation5 + $0x58] sm:$0xff]
    %v114 = vld [vmem:[#allocation5 + $0x60] sm:$0xff]
    %v115 = vld [vmem:[#allocation5 + $0x68] sm:$0xff]
    %v116 = vld [vmem:[#allocation5 + $0x70] sm:$0xff]
    %v117 = vld [vmem:[#allocation5 + $0x78] sm:$0xff]
    %v118 = vld [vmem:[#allocation5 + $0x80] sm:$0xff]
    %v119 = vld [vmem:[#allocation5 + $0x88] sm:$0xff]
    %v120 = vld [vmem:[#allocation5 + $0x90] sm:$0xff]
    %v121 = vld [vmem:[#allocation5 + $0x98] sm:$0xff]
    %v122 = vld [vmem:[#allocation5 + $0xa0] sm:$0xff]
    %v123 = vld [vmem:[#allocation5 + $0xa8] sm:$0xff]
    %v124 = vld [vmem:[#allocation5 + $0xb0] sm:$0xff]
    %v125 = vld [vmem:[#allocation5 + $0xb8] sm:$0xff]
    %v126 = vld [vmem:[#allocation5 + $0xc0] sm:$0xff]
    %v127 = vld [vmem:[#allocation5 + $0xc8] sm:$0xff]
    %v128 = vld [vmem:[#allocation5 + $0xd0] sm:$0xff]
    %v129 = vld [vmem:[#allocation5 + $0xd8] sm:$0xff]
    %v130 = vld [vmem:[#allocation5 + $0xe0] sm:$0xff]
    %v131 = vld [vmem:[#allocation5 + $0xe8] sm:$0xff]
    %v132 = vld [vmem:[#allocation5 + $0xf0] sm:$0xff]
    %v133 = vld [vmem:[#allocation5 + $0xf8] sm:$0xff]
    %v134 = vld [vmem:[#allocation7] sm:$0x3]
    %v136 = vperm.slane %v134, 0
    %v137 = vperm.slane %v134, 1
    %140 = vmatpush.msra.mxu0 %v132
    %141 = vmatpush.msra.mxu0 %v130
    %142 = vmatpush.msra.mxu0 %v128
    %143 = vmatpush.msra.mxu0 %v126
    %144 = vmatpush.msra.mxu0 %v124
    %145 = vmatpush.msra.mxu0 %v122
    %146 = vmatpush.msra.mxu0 %v120
    %147 = vmatpush.msra.mxu0 %v118
    %148 = vmatpush.msra.mxu0 %v116
    %149 = vmatpush.msra.mxu0 %v114
    %150 = vmatpush.msra.mxu0 %v112
    %151 = vmatpush.msra.mxu0 %v110
    %152 = vmatpush.msra.mxu0 %v108
    %153 = vmatpush.msra.mxu0 %v106
    %154 = vmatpush.msra.mxu0 %v104
    %155 = vmatpush.msra.mxu0 %v102
    %156 = vmatmul.f32.gmra.mxu0 %v101
    %v157 = vpop.f32.mrf.mxu0
    %v158 = vadd.f32 %v136, %v157
    %159 = vdwg.mxu0
    %160 = vmatpush.msra.mxu0 %v133
    %161 = vmatpush.msra.mxu0 %v131
    %162 = vmatpush.msra.mxu0 %v129
    %163 = vmatpush.msra.mxu0 %v127
    %164 = vmatpush.msra.mxu0 %v125
    %165 = vmatpush.msra.mxu0 %v123
    %166 = vmatpush.msra.mxu0 %v121
    %167 = vmatpush.msra.mxu0 %v119
    %168 = vmatpush.msra.mxu0 %v117
    %169 = vmatpush.msra.mxu0 %v115
    %170 = vmatpush.msra.mxu0 %v113
    %171 = vmatpush.msra.mxu0 %v111
    %172 = vmatpush.msra.mxu0 %v109
    %173 = vmatpush.msra.mxu0 %v107
    %174 = vmatpush.msra.mxu0 %v105
    %175 = vmatpush.msra.mxu0 %v103
    %176 = vmatmul.f32.gmra.mxu0 %v101
    %v177 = vpop.f32.mrf.mxu0
    %v178 = vadd.f32 %v137, %v177
    %179 = vdwg.mxu0
    %v180 = vmax.f32 %v158, 0.0
    %v181 = vmax.f32 %v178, 0.0
    %v182 = vld [vmem:[#allocation8] sm:$0xff]
    %v183 = vld [vmem:[#allocation8 + $0x8] sm:$0xff]
    %v184 = vld [vmem:[#allocation8 + $0x10] sm:$0xff]
    %v185 = vld [vmem:[#allocation8 + $0x18] sm:$0xff]
    %v186 = vld [vmem:[#allocation8 + $0x20] sm:$0xff]
    %v187 = vld [vmem:[#allocation8 + $0x28] sm:$0xff]
    %v188 = vld [vmem:[#allocation8 + $0x30] sm:$0xff]
    %v189 = vld [vmem:[#allocation8 + $0x38] sm:$0xff]
    %v190 = vld [vmem:[#allocation8 + $0x40] sm:$0xff]
    %v191 = vld [vmem:[#allocation8 + $0x48] sm:$0xff]
    %v192 = vld [vmem:[#allocation8 + $0x50] sm:$0xff]
    %v193 = vld [vmem:[#allocation8 + $0x58] sm:$0xff]
    %v194 = vld [vmem:[#allocation8 + $0x60] sm:$0xff]
    %v195 = vld [vmem:[#allocation8 + $0x68] sm:$0xff]
    %v196 = vld [vmem:[#allocation8 + $0x70] sm:$0xff]
    %v197 = vld [vmem:[#allocation8 + $0x78] sm:$0xff]
    %v198 = vld [vmem:[#allocation8 + $0x80] sm:$0xff]
    %v199 = vld [vmem:[#allocation8 + $0x88] sm:$0xff]
    %v200 = vld [vmem:[#allocation8 + $0x90] sm:$0xff]
    %v201 = vld [vmem:[#allocation8 + $0x98] sm:$0xff]
    %v202 = vld [vmem:[#allocation8 + $0xa0] sm:$0xff]
    %v203 = vld [vmem:[#allocation8 + $0xa8] sm:$0xff]
    %v204 = vld [vmem:[#allocation8 + $0xb0] sm:$0xff]
    %v205 = vld [vmem:[#allocation8 + $0xb8] sm:$0xff]
    %v206 = vld [vmem:[#allocation8 + $0xc0] sm:$0xff]
    %v207 = vld [vmem:[#allocation8 + $0xc8] sm:$0xff]
    %v208 = vld [vmem:[#allocation8 + $0xd0] sm:$0xff]
    %v209 = vld [vmem:[#allocation8 + $0xd8] sm:$0xff]
    %v210 = vld [vmem:[#allocation8 + $0xe0] sm:$0xff]
    %v211 = vld [vmem:[#allocation8 + $0xe8] sm:$0xff]
    %v212 = vld [vmem:[#allocation8 + $0xf0] sm:$0xff]
    %v213 = vld [vmem:[#allocation8 + $0xf8] sm:$0xff]
    %v214 = vld [vmem:[#allocation8 + $0x100] sm:$0xff]
    %v215 = vld [vmem:[#allocation8 + $0x108] sm:$0xff]
    %v216 = vld [vmem:[#allocation8 + $0x110] sm:$0xff]
    %v217 = vld [vmem:[#allocation8 + $0x118] sm:$0xff]
    %v218 = vld [vmem:[#allocation8 + $0x120] sm:$0xff]
    %v219 = vld [vmem:[#allocation8 + $0x128] sm:$0xff]
    %v220 = vld [vmem:[#allocation8 + $0x130] sm:$0xff]
    %v221 = vld [vmem:[#allocation8 + $0x138] sm:$0xff]
    %v222 = vld [vmem:[#allocation8 + $0x140] sm:$0xff]
    %v223 = vld [vmem:[#allocation8 + $0x148] sm:$0xff]
    %v224 = vld [vmem:[#allocation8 + $0x150] sm:$0xff]
    %v225 = vld [vmem:[#allocation8 + $0x158] sm:$0xff]
    %v226 = vld [vmem:[#allocation8 + $0x160] sm:$0xff]
    %v227 = vld [vmem:[#allocation8 + $0x168] sm:$0xff]
    %v228 = vld [vmem:[#allocation8 + $0x170] sm:$0xff]
    %v229 = vld [vmem:[#allocation8 + $0x178] sm:$0xff]
    %v230 = vld [vmem:[#allocation8 + $0x180] sm:$0xff]
    %v231 = vld [vmem:[#allocation8 + $0x188] sm:$0xff]
    %v232 = vld [vmem:[#allocation8 + $0x190] sm:$0xff]
    %v233 = vld [vmem:[#allocation8 + $0x198] sm:$0xff]
    %v234 = vld [vmem:[#allocation8 + $0x1a0] sm:$0xff]
    %v235 = vld [vmem:[#allocation8 + $0x1a8] sm:$0xff]
    %v236 = vld [vmem:[#allocation8 + $0x1b0] sm:$0xff]
    %v237 = vld [vmem:[#allocation8 + $0x1b8] sm:$0xff]
    %v238 = vld [vmem:[#allocation8 + $0x1c0] sm:$0xff]
    %v239 = vld [vmem:[#allocation8 + $0x1c8] sm:$0xff]
    %v240 = vld [vmem:[#allocation8 + $0x1d0] sm:$0xff]
    %v241 = vld [vmem:[#allocation8 + $0x1d8] sm:$0xff]
    %v242 = vld [vmem:[#allocation8 + $0x1e0] sm:$0xff]
    %v243 = vld [vmem:[#allocation8 + $0x1e8] sm:$0xff]
    %v244 = vld [vmem:[#allocation8 + $0x1f0] sm:$0xff]
    %v245 = vld [vmem:[#allocation8 + $0x1f8] sm:$0xff]
    %v246 = vld [vmem:[%s4] sm:$0x3]
    %v248 = vperm.slane %v246, 0
    %v249 = vperm.slane %v246, 1
    %252 = vmatpush.msra.mxu0 %v212
    %253 = vmatpush.msra.mxu0 %v210
    %254 = vmatpush.msra.mxu0 %v208
    %255 = vmatpush.msra.mxu0 %v206
    %256 = vmatpush.msra.mxu0 %v204
    %257 = vmatpush.msra.mxu0 %v202
    %258 = vmatpush.msra.mxu0 %v200
    %259 = vmatpush.msra.mxu0 %v198
    %260 = vmatpush.msra.mxu0 %v196
    %261 = vmatpush.msra.mxu0 %v194
    %262 = vmatpush.msra.mxu0 %v192
    %263 = vmatpush.msra.mxu0 %v190
    %264 = vmatpush.msra.mxu0 %v188
    %265 = vmatpush.msra.mxu0 %v186
    %266 = vmatpush.msra.mxu0 %v184
    %267 = vmatpush.msra.mxu0 %v182
    %268 = vmatmul.f32.gmra.mxu0 %v180
    %v269 = vpop.f32.mrf.mxu0
    %v270 = vadd.f32 %v248, %v269
    %271 = vdwg.mxu0
    %272 = vmatpush.msra.mxu0 %v244
    %273 = vmatpush.msra.mxu0 %v242
    %274 = vmatpush.msra.mxu0 %v240
    %275 = vmatpush.msra.mxu0 %v238
    %276 = vmatpush.msra.mxu0 %v236
    %277 = vmatpush.msra.mxu0 %v234
    %278 = vmatpush.msra.mxu0 %v232
    %279 = vmatpush.msra.mxu0 %v230
    %280 = vmatpush.msra.mxu0 %v228
    %281 = vmatpush.msra.mxu0 %v226
    %282 = vmatpush.msra.mxu0 %v224
    %283 = vmatpush.msra.mxu0 %v222
    %284 = vmatpush.msra.mxu0 %v220
    %285 = vmatpush.msra.mxu0 %v218
    %286 = vmatpush.msra.mxu0 %v216
    %287 = vmatpush.msra.mxu0 %v214
    %288 = vmatmul.f32.gmra.mxu0 %v181
    %v289 = vpop.f32.mrf.mxu0
    %v290 = vadd.f32 %v270, %v289
    %291 = vdwg.mxu0
    %292 = vmatpush.msra.mxu0 %v213
    %293 = vmatpush.msra.mxu0 %v211
    %294 = vmatpush.msra.mxu0 %v209
    %295 = vmatpush.msra.mxu0 %v207
    %296 = vmatpush.msra.mxu0 %v205
    %297 = vmatpush.msra.mxu0 %v203
    %298 = vmatpush.msra.mxu0 %v201
    %299 = vmatpush.msra.mxu0 %v199
    %300 = vmatpush.msra.mxu0 %v197
    %301 = vmatpush.msra.mxu0 %v195
    %302 = vmatpush.msra.mxu0 %v193
    %303 = vmatpush.msra.mxu0 %v191
    %304 = vmatpush.msra.mxu0 %v189
    %305 = vmatpush.msra.mxu0 %v187
    %306 = vmatpush.msra.mxu0 %v185
    %307 = vmatpush.msra.mxu0 %v183
    %308 = vmatmul.f32.gmra.mxu0 %v180
    %v309 = vpop.f32.mrf.mxu0
    %v310 = vadd.f32 %v249, %v309
    %311 = vdwg.mxu0
    %312 = vmatpush.msra.mxu0 %v245
    %313 = vmatpush.msra.mxu0 %v243
    %314 = vmatpush.msra.mxu0 %v241
    %315 = vmatpush.msra.mxu0 %v239
    %316 = vmatpush.msra.mxu0 %v237
    %317 = vmatpush.msra.mxu0 %v235
    %318 = vmatpush.msra.mxu0 %v233
    %319 = vmatpush.msra.mxu0 %v231
    %320 = vmatpush.msra.mxu0 %v229
    %321 = vmatpush.msra.mxu0 %v227
    %322 = vmatpush.msra.mxu0 %v225
    %323 = vmatpush.msra.mxu0 %v223
    %324 = vmatpush.msra.mxu0 %v221
    %325 = vmatpush.msra.mxu0 %v219
    %326 = vmatpush.msra.mxu0 %v217
    %327 = vmatpush.msra.mxu0 %v215
    %328 = vmatmul.f32.gmra.mxu0 %v181
    %v329 = vpop.f32.mrf.mxu0
    %v330 = vadd.f32 %v310, %v329
    %331 = vdwg.mxu0
    %v332 = vmax.f32 %v290, 0.0
    %v333 = vmax.f32 %v330, 0.0
    %v334 = vld [vmem:[#allocation10] sm:$0xff]
    %v335 = vld [vmem:[#allocation10 + $0x8] sm:$0xff]
    %v336 = vld [vmem:[#allocation10 + $0x10] sm:$0xff]
    %v337 = vld [vmem:[#allocation10 + $0x18] sm:$0xff]
    %v338 = vld [vmem:[#allocation10 + $0x20] sm:$0xff]
    %v339 = vld [vmem:[#allocation10 + $0x28] sm:$0xff]
    %v340 = vld [vmem:[#allocation10 + $0x30] sm:$0xff]
    %v341 = vld [vmem:[#allocation10 + $0x38] sm:$0xff]
    %v342 = vld [vmem:[#allocation10 + $0x40] sm:$0xff]
    %v343 = vld [vmem:[#allocation10 + $0x48] sm:$0xff]
    %v344 = vld [vmem:[#allocation10 + $0x50] sm:$0xff]
    %v345 = vld [vmem:[#allocation10 + $0x58] sm:$0xff]
    %v346 = vld [vmem:[#allocation10 + $0x60] sm:$0xff]
    %v347 = vld [vmem:[#allocation10 + $0x68] sm:$0xff]
    %v348 = vld [vmem:[#allocation10 + $0x70] sm:$0xff]
    %v349 = vld [vmem:[#allocation10 + $0x78] sm:$0xff]
    %v350 = vld [vmem:[#allocation10 + $0x80] sm:$0xff]
    %v351 = vld [vmem:[#allocation10 + $0x88] sm:$0xff]
    %v352 = vld [vmem:[#allocation10 + $0x90] sm:$0xff]
    %v353 = vld [vmem:[#allocation10 + $0x98] sm:$0xff]
    %v354 = vld [vmem:[#allocation10 + $0xa0] sm:$0xff]
    %v355 = vld [vmem:[#allocation10 + $0xa8] sm:$0xff]
    %v356 = vld [vmem:[#allocation10 + $0xb0] sm:$0xff]
    %v357 = vld [vmem:[#allocation10 + $0xb8] sm:$0xff]
    %v358 = vld [vmem:[#allocation10 + $0xc0] sm:$0xff]
    %v359 = vld [vmem:[#allocation10 + $0xc8] sm:$0xff]
    %v360 = vld [vmem:[#allocation10 + $0xd0] sm:$0xff]
    %v361 = vld [vmem:[#allocation10 + $0xd8] sm:$0xff]
    %v362 = vld [vmem:[#allocation10 + $0xe0] sm:$0xff]
    %v363 = vld [vmem:[#allocation10 + $0xe8] sm:$0xff]
    %v364 = vld [vmem:[#allocation10 + $0xf0] sm:$0xff]
    %v365 = vld [vmem:[#allocation10 + $0xf8] sm:$0xff]
    %v366 = vld [vmem:[%s6] sm:$0x1]
    %v368 = vperm.slane %v366, 0
    %370 = vmatpush.msra.mxu0 %v349
    %371 = vmatpush.msra.mxu0 %v348
    %372 = vmatpush.msra.mxu0 %v347
    %373 = vmatpush.msra.mxu0 %v346
    %374 = vmatpush.msra.mxu0 %v345
    %375 = vmatpush.msra.mxu0 %v344
    %376 = vmatpush.msra.mxu0 %v343
    %377 = vmatpush.msra.mxu0 %v342
    %378 = vmatpush.msra.mxu0 %v341
    %379 = vmatpush.msra.mxu0 %v340
    %380 = vmatpush.msra.mxu0 %v339
    %381 = vmatpush.msra.mxu0 %v338
    %382 = vmatpush.msra.mxu0 %v337
    %383 = vmatpush.msra.mxu0 %v336
    %384 = vmatpush.msra.mxu0 %v335
    %385 = vmatpush.msra.mxu0 %v334
    %386 = vmatmul.f32.gmra.mxu0 %v332
    %v387 = vpop.f32.mrf.mxu0
    %v388 = vadd.f32 %v368, %v387
    %389 = vdwg.mxu0
    %390 = vmatpush.msra.mxu0 %v365
    %391 = vmatpush.msra.mxu0 %v364
    %392 = vmatpush.msra.mxu0 %v363
    %393 = vmatpush.msra.mxu0 %v362
    %394 = vmatpush.msra.mxu0 %v361
    %395 = vmatpush.msra.mxu0 %v360
    %396 = vmatpush.msra.mxu0 %v359
    %397 = vmatpush.msra.mxu0 %v358
    %398 = vmatpush.msra.mxu0 %v357
    %399 = vmatpush.msra.mxu0 %v356
    %400 = vmatpush.msra.mxu0 %v355
    %401 = vmatpush.msra.mxu0 %v354
    %402 = vmatpush.msra.mxu0 %v353
    %403 = vmatpush.msra.mxu0 %v352
    %404 = vmatpush.msra.mxu0 %v351
    %405 = vmatpush.msra.mxu0 %v350
    %406 = vmatmul.f32.gmra.mxu0 %v333
    %v407 = vpop.f32.mrf.mxu0
    %v408 = vadd.f32 %v388, %v407
    %409 = vdwg.mxu0
    %v410 = vtanh.pop %v408
    %v411 = vmul.f32 %v410, 2.0
    %412 = vst [vmem:[#allocation11] sm:$0xff] %v411
    // Predicated region
    $region50: #{tpu_custom_call.1} parent=1 // pred_check
      _
    $region51: #{tpu_custom_call.1} parent=1 // pred_check_branch
      %414 = sbr.rel (0) target = $region53
    $region52: #{tpu_custom_call.1} parent=1 // pred_region
      %416 = vsyncadd [#allocation4], 0
      %s418 = sshll.u32 [#allocation11], 4
      %s419 = int_to_ptr.vmem [resolvable:$true] %s418
      %s420 = sshll.u32 %s7, 4
      %s421 = int_to_ptr.hbm [resolvable:$true] %s420
      %423 = dma.vmem_to_hbm [thread:$0]  %s419, 128, %s421, [#allocation4]
    $region53: #{tpu_custom_call.1} parent=1 // pred_fallthru
      _
    // Predicated region
    $region54: #{tpu_custom_call.1} parent=1 // pred_check
      _
    $region55: #{tpu_custom_call.1} parent=1 // pred_check_branch
      %425 = sbr.rel (0) target = $region57
    $region56: #{tpu_custom_call.1} parent=1 // pred_region
      %427 = dma.done [#allocation4], 128
    $region57: #{tpu_custom_call.1} parent=1 // pred_fallthru
      _
    %428 = vsyncpa [#allocation3], 1
    %429 = vsyncpa [#allocation6], 1
    %430 = vsyncpa [#allocation9], 1
    %431 = vsyncpa [#allocation4], 1

</llo_original>
